<compile_context>
chip_gen: v7x
topology: tpu7x:2x2x1
jax: 0.10.0
libtpu: 0.0.40
codegen_flags: <defaults>
</compile_context>

<pallas_src>
import jax
import jax.numpy as jnp
import numpy as np
from jax import lax
from jax.experimental import pallas as pl
from jax.experimental.pallas import tpu as pltpu

_VMEM_LIMIT = 48 * 1024 * 1024  # stay under v7x's 64 MiB physical VMEM


# ----------------------------- in-kernel helpers ---------------------------- #

def _shift_from_left(t):
    """s[:, x, :] = t[:, x-1, :]  (zero column at x == 0)."""
    zero = jnp.zeros((t.shape[0], 1, t.shape[2]), t.dtype)
    return jnp.concatenate([zero, t[:, :-1, :]], axis=1)


def _shift_from_right(t):
    """s[:, x, :] = t[:, x+1, :]  (zero column at x == W-1)."""
    zero = jnp.zeros((t.shape[0], 1, t.shape[2]), t.dtype)
    return jnp.concatenate([t[:, 1:, :], zero], axis=1)


# ----------------------------- kernels ------------------------------------- #

def conv1x1_relu_kernel(x_ref, w_ref, b_ref, o_ref):
    # x_ref: (TM, Cin)  w_ref: (Cin, Cout)  b_ref: (1, Cout)  o_ref: (TM, Cout)
    acc = jnp.dot(x_ref[...], w_ref[...], preferred_element_type=jnp.float32)
    o_ref[...] = jnp.maximum(acc + b_ref[...], 0.0).astype(o_ref.dtype)


def fused_block_kernel(uup_ref, x2_ref, w1_ref, b1_ref, w2_ref, b2_ref,
                       o_ref, xcat1_ref, xcat2_ref, acc_ref):
    """Per-image: cat([u_up, x2]) -> 3x3 conv + ReLU -> 3x3 conv + ReLU.

    uup_ref: (1, H, W, Cu)   x2_ref: (1, H, W, C2)
    w1_ref:  (3, 3*(Cu+C2), Cout)  == HWIO w1 reshaped (ky, kx*Cin + c, o)
    w2_ref:  (3, 3*Cout, Cout)
    o_ref:   (1, H*W, Cout)
    xcat*_ref: H-zero-padded, W-im2col'd inputs (VMEM scratch)
    acc_ref: (H*W, Cout) fp32 accumulator (VMEM scratch), bias-initialized.
    """
    _, h, w, _ = uup_ref.shape
    m = h * w
    cout = o_ref.shape[-1]
    k1 = xcat1_ref.shape[-1]
    k2 = xcat2_ref.shape[-1]

    up = uup_ref[0]      # (H, W, Cu)  upsampled 1x1-conv branch
    sk = x2_ref[0]       # (H, W, C2)  skip connection

    # ---- conv #1: channel concat realized as one wide-K feature tensor ------
    # channel layout: [kx=0 | kx=1 | kx=2], each group in concat order [up, sk]
    # -> matches w1 (HWIO) reshaped to (3, 3*Cin, Cout).
    feat1 = jnp.concatenate(
        [_shift_from_left(up), _shift_from_left(sk),
         up, sk,
         _shift_from_right(up), _shift_from_right(sk)], axis=-1)
    zrow1 = jnp.zeros((w, k1), jnp.float32)
    xcat1_ref[0] = zrow1                    # top H halo (zero padding)
    xcat1_ref[h + 1] = zrow1                # bottom H halo
    xcat1_ref[pl.ds(1, h)] = feat1          # interior rows

    acc_ref[...] = jnp.broadcast_to(b1_ref[...], (m, cout))   # bias in init
    for ky in range(3):                                        # 3 row taps
        slab = xcat1_ref[pl.ds(ky, h)].reshape(m, k1)          # contiguous
        acc_ref[...] += jnp.dot(slab, w1_ref[ky],
                                preferred_element_type=jnp.float32)
    y1 = jnp.maximum(acc_ref[...], 0.0)                        # (M, Cout)

    # ---- conv #2 -------------------------------------------------------------
    y1_3d = y1.reshape(h, w, cout)
    feat2 = jnp.concatenate(
        [_shift_from_left(y1_3d), y1_3d, _shift_from_right(y1_3d)], axis=-1)
    zrow2 = jnp.zeros((w, k2), jnp.float32)
    xcat2_ref[0] = zrow2
    xcat2_ref[h + 1] = zrow2
    xcat2_ref[pl.ds(1, h)] = feat2

    acc_ref[...] = jnp.broadcast_to(b2_ref[...], (m, cout))
    for ky in range(3):
        slab = xcat2_ref[pl.ds(ky, h)].reshape(m, k2)
        acc_ref[...] += jnp.dot(slab, w2_ref[ky],
                                preferred_element_type=jnp.float32)
    # TODO(synk): for tiny Cout the final store is lane-sparse; fold W into the
    # lane axis (out block (H, W*Cout)) once Mosaic relayout cost is validated.
    o_ref[0] = jnp.maximum(acc_ref[...], 0.0).astype(o_ref.dtype)


# ----------------------------- wrappers ------------------------------------ #

def conv1x1_relu(x2d, w, b, *, tm=256):
    """(M, Cin) @ (Cin, Cout) + b, ReLU — tiled over M rows."""
    m, cin = x2d.shape
    cout = w.shape[-1]
    tm = min(tm, m)
    if tm != m:
        tm = max(8, (tm // 8) * 8)
    return pl.pallas_call(
        conv1x1_relu_kernel,
        out_shape=jax.ShapeDtypeStruct((m, cout), jnp.float32),
        grid=(pl.cdiv(m, tm),),
        in_specs=[
            pl.BlockSpec((tm, cin), lambda i: (i, 0)),
            pl.BlockSpec((cin, cout), lambda i: (0, 0)),
            pl.BlockSpec((1, cout), lambda i: (0, 0)),
        ],
        out_specs=pl.BlockSpec((tm, cout), lambda i: (i, 0)),
        compiler_params=pltpu.CompilerParams(
            dimension_semantics=("parallel",),
            vmem_limit_bytes=_VMEM_LIMIT),
    )(x2d, w, b.reshape(1, cout))


def fused_block(u_up, x2, w1k, b1, w2k, b2):
    """Fused concat + Conv3x3/ReLU + Conv3x3/ReLU, gridded over batch."""
    n, h2, wd2, cu = u_up.shape
    c2 = x2.shape[-1]
    cout = w1k.shape[-1]
    m2 = h2 * wd2
    k1 = w1k.shape[1]
    k2 = w2k.shape[1]
    # TODO(synk): for large images, tile H into row blocks with a manual-DMA
    # (pl.ANY) halo instead of one whole image per grid step.
    return pl.pallas_call(
        fused_block_kernel,
        out_shape=jax.ShapeDtypeStruct((n, m2, cout), jnp.float32),
        grid=(n,),
        in_specs=[
            pl.BlockSpec((1, h2, wd2, cu), lambda i: (i, 0, 0, 0)),
            pl.BlockSpec((1, h2, wd2, c2), lambda i: (i, 0, 0, 0)),
            pl.BlockSpec((3, k1, cout), lambda i: (0, 0, 0)),
            pl.BlockSpec((1, cout), lambda i: (0, 0)),
            pl.BlockSpec((3, k2, cout), lambda i: (0, 0, 0)),
            pl.BlockSpec((1, cout), lambda i: (0, 0)),
        ],
        out_specs=pl.BlockSpec((1, m2, cout), lambda i: (i, 0, 0)),
        scratch_shapes=[
            pltpu.VMEM((h2 + 2, wd2, k1), jnp.float32),
            pltpu.VMEM((h2 + 2, wd2, k2), jnp.float32),
            pltpu.VMEM((m2, cout), jnp.float32),
        ],
        compiler_params=pltpu.CompilerParams(
            dimension_semantics=("parallel",),
            vmem_limit_bytes=_VMEM_LIMIT),
    )(u_up, x2, w1k, b1, w2k, b2)


def unet_upx2_forward(x1_nchw, x2_nchw, params):
    # NCHW (PyTorch) -> NHWC for the kernels, back to NCHW at the end.
    x1 = jnp.transpose(x1_nchw, (0, 2, 3, 1))
    x2 = jnp.transpose(x2_nchw, (0, 2, 3, 1))
    n, h1, w1d, cin = x1.shape
    _, h2, w2d, c2 = x2.shape
    cu = params["w_up"].shape[-1]
    cout = params["w1"].shape[-1]

    # upscale branch: 1x1 conv + ReLU (Pallas), nearest 2x upsample (XLA glue).
    u = conv1x1_relu(x1.reshape(n * h1 * w1d, cin),
                     params["w_up"], params["b_up"])
    u = u.reshape(n, h1, w1d, cu)
    # TODO(synk): fuse the nearest-2x upsample into fused_block (row index_map
    # trick / in-kernel sublane repeat) to remove this HBM round trip of u_up.
    u_up = jnp.repeat(jnp.repeat(u, 2, axis=1), 2, axis=2)

    # HWIO (3,3,Cin,Cout) -> (3, 3*Cin, Cout): K-major over (kx, c) to match the
    # in-kernel W-direction im2col layout.
    w1k = params["w1"].reshape(3, 3 * (cu + c2), cout)
    w2k = params["w2"].reshape(3, 3 * cout, cout)

    out = fused_block(u_up, x2, w1k, params["b1"].reshape(1, cout),
                      w2k, params["b2"].reshape(1, cout))
    out = out.reshape(n, h2, w2d, cout)
    return jnp.transpose(out, (0, 3, 1, 2))


# ----------------------------- reference (pure JAX) ------------------------- #

def _conv_ref(x_nhwc, w_hwio, b, pad):
    out = lax.conv_general_dilated(
        x_nhwc, w_hwio, window_strides=(1, 1), padding=pad,
        dimension_numbers=("NHWC", "HWIO", "NHWC"))
    return jnp.maximum(out + b[None, None, None, :], 0.0)


def unet_upx2_reference(x1_nchw, x2_nchw, params):
    x1 = jnp.transpose(x1_nchw, (0, 2, 3, 1))
    x2 = jnp.transpose(x2_nchw, (0, 2, 3, 1))
    u = _conv_ref(x1, params["w_up"][None, None], params["b_up"], "VALID")
    u = jnp.repeat(jnp.repeat(u, 2, axis=1), 2, axis=2)
    x = jnp.concatenate([u, x2], axis=-1)
    x = _conv_ref(x, params["w1"], params["b1"], "SAME")
    x = _conv_ref(x, params["w2"], params["b2"], "SAME")
    return jnp.transpose(x, (0, 3, 1, 2))


# ----------------------------- main ----------------------------------------- #

if __name__ == "__main__":
    key = jax.random.PRNGKey(0)
    in_ch, out_ch = 8, 4
    N, H, W = 2, 16, 16  # x1 spatial; x2 is 2x larger

    ks = jax.random.split(key, 8)
    params = {
        # upscale 1x1 conv: (Cin, Cout); block 3x3 convs: HWIO (3,3,Cin,Cout)
        "w_up": 0.1 * jax.random.normal(ks[0], (in_ch, out_ch), jnp.float32),
        "b_up": 0.1 * jax.random.normal(ks[1], (out_ch,), jnp.float32),
        "w1": 0.1 * jax.random.normal(ks[2], (3, 3, in_ch, out_ch), jnp.float32),
        "b1": 0.1 * jax.random.normal(ks[3], (out_ch,), jnp.float32),
        "w2": 0.1 * jax.random.normal(ks[4], (3, 3, out_ch, out_ch), jnp.float32),
        "b2": 0.1 * jax.random.normal(ks[5], (out_ch,), jnp.float32),
    }

    x1 = jax.random.normal(ks[6], (N, in_ch, H, W), jnp.float32)            # NCHW
    x2 = jax.random.normal(ks[7], (N, in_ch - out_ch, 2 * H, 2 * W),
                           jnp.float32)                                      # NCHW

    out = jax.block_until_ready(unet_upx2_forward(x1, x2, params))
    ref = jax.block_until_ready(unet_upx2_reference(x1, x2, params))

    assert out.shape == (N, out_ch, 2 * H, 2 * W), out.shape
    np.testing.assert_allclose(np.asarray(out), np.asarray(ref),
                               rtol=1e-5, atol=1e-5)
    print("KERNEL_OK")
</pallas_src>

<mosaic_0001>
module attributes {stable_mosaic.version = 11 : i64} {
  func.func @conv1x1_relu_kernel(%arg0: i32, %arg1: memref<256x8xf32, #tpu.memory_space<vmem>>, %arg2: memref<8x4xf32, #tpu.memory_space<vmem>>, %arg3: memref<1x4xf32, #tpu.memory_space<vmem>>, %arg4: memref<256x4xf32, #tpu.memory_space<vmem>>) attributes {dimension_semantics = [#tpu.dimension_semantics<parallel>], iteration_bounds = array<i64: 2>, scalar_prefetch = 0 : i64, scratch_operands = 0 : i64, tpu.core_type = #tpu.core_type<tc>, window_params = [{transform_indices = @transform_0, window_bounds = array<i64: 256, 8>}, {pipeline_mode = #tpu.pipeline_mode<synchronous>, transform_indices = @transform_1, window_bounds = array<i64: 8, 4>}, {pipeline_mode = #tpu.pipeline_mode<synchronous>, transform_indices = @transform_2, window_bounds = array<i64: 1, 4>}, {transform_indices = @transform_3, window_bounds = array<i64: 256, 4>}]} {
    %c0 = arith.constant 0 : index
    %c0_0 = arith.constant 0 : index
    %0 = vector.load %arg1[%c0, %c0_0] : memref<256x8xf32, #tpu.memory_space<vmem>>, vector<256x8xf32>
    %c0_1 = arith.constant 0 : index
    %c0_2 = arith.constant 0 : index
    %1 = vector.load %arg2[%c0_1, %c0_2] : memref<8x4xf32, #tpu.memory_space<vmem>>, vector<8x4xf32>
    %cst = arith.constant dense<0.000000e+00> : vector<256x4xf32>
    %2 = tpu.matmul %0, %1, %cst {dimension_numbers = #tpu.dot_dimension_numbers<[1], [0], [0], [1], [0, 0, 1, 1], [], []>} : vector<256x8xf32>, vector<8x4xf32>, vector<256x4xf32> -> vector<256x4xf32>
    %c0_3 = arith.constant 0 : index
    %c0_4 = arith.constant 0 : index
    %3 = vector.load %arg3[%c0_3, %c0_4] : memref<1x4xf32, #tpu.memory_space<vmem>>, vector<1x4xf32>
    %4 = vector.broadcast %3 : vector<1x4xf32> to vector<256x4xf32>
    %5 = arith.addf %2, %4 : vector<256x4xf32>
    %cst_5 = arith.constant 0.000000e+00 : f32
    %6 = vector.broadcast %cst_5 : f32 to vector<256x4xf32>
    %7 = arith.maximumf %5, %6 : vector<256x4xf32>
    %c0_6 = arith.constant 0 : index
    %c0_7 = arith.constant 0 : index
    %8 = vector.load %arg4[%c0_6, %c0_7] : memref<256x4xf32, #tpu.memory_space<vmem>>, vector<256x4xf32>
    tpu.vector_store %arg4[%c0_6, %c0_7], %7 {strides = array<i32>} : memref<256x4xf32, #tpu.memory_space<vmem>>, vector<256x4xf32>,
    return
  }
  func.func @transform_0(%arg0: i32) -> (i32, i32) {
    %c0_i32 = arith.constant 0 : i32
    %c0_i32_0 = arith.constant 0 : i32
    return %arg0, %c0_i32 : i32, i32
  }
  func.func @transform_1(%arg0: i32) -> (i32, i32) {
    %c0_i32 = arith.constant 0 : i32
    %c0_i32_0 = arith.constant 0 : i32
    %c0_i32_1 = arith.constant 0 : i32
    return %c0_i32, %c0_i32_0 : i32, i32
  }
  func.func @transform_2(%arg0: i32) -> (i32, i32) {
    %c0_i32 = arith.constant 0 : i32
    %c0_i32_0 = arith.constant 0 : i32
    %c0_i32_1 = arith.constant 0 : i32
    return %c0_i32, %c0_i32_0 : i32, i32
  }
  func.func @transform_3(%arg0: i32) -> (i32, i32) {
    %c0_i32 = arith.constant 0 : i32
    %c0_i32_0 = arith.constant 0 : i32
    return %arg0, %c0_i32 : i32, i32
  }
}

</mosaic_0001>

<llo_original>
// kernel: tpu_custom_call.1
$region0: #{tpu_custom_call.1}
  #allocation0 [shape = 'u32[]', space=smem, size = 0x4, offset = 0x4, fixed_abs, tag = 'smem constant byte address 0x4 - core index']
  #allocation1 [shape = 'u32[144,128]{1,0:T(1,128)}', space=vmem, size = 0x12000, scoped, tag = 'internal scratch']
  %s0 = inlined_call_operand.vmem [shape: f32[512,8], index: 0, kind: input, shape index: {}]
  %s1 = inlined_call_operand.vmem [shape: f32[8,4], index: 1, kind: input, shape index: {}]
  %s2 = inlined_call_operand.vmem [shape: f32[1,4], index: 2, kind: input, shape index: {}]
  %s3 = inlined_call_operand.vmem [shape: f32[512,4], index: 3, kind: output, shape index: {}]
  %s4 = sld [smem:[#allocation0]]
  $region45: #{tpu_custom_call.1} parent=0
    _
  %s6 = ssub.s32 1, %s4
  %s7 = scalar_select 0, %s6, %s4
  loop: start=0, step=1, limit=4
  $region2: #{tpu_custom_call.1} parent=0 // loop_pre_header
    _
  $region3: #{tpu_custom_call.1} parent=0 // loop_header
    %s9 = sphi 0, %s13
    %p10 = scmp.ge.s32.totalorder %s9, 4
    %s19 = sphi 0, %s21
    %s22 = sphi 0, %s19
    %s23 = sphi 0, %s22
    %s39 = sphi 0, %s23
    %s43 = sphi 0, %s43
    %s45 = sphi 0, %s43
    %s46 = sphi 0, %s45
    %s60 = sphi 0, %s46
    %s64 = sphi 0, %s64
    %s66 = sphi 0, %s64
    %s67 = sphi 0, %s66
    %s81 = sphi 0, %s67
    %s87 = sphi 0, %s89
    %s90 = sphi 0, %s87
    %s91 = sphi 0, %s90
    %s107 = sphi 0, %s91
  $region4: #{tpu_custom_call.1} parent=0 // loop_header_branch
    %12 = sbr.rel (%p10) target = $region8
  $region5: #{tpu_custom_call.1} parent=0 // loop_body
    %s14 = ssub.s32 %s9, 1
    %s15 = ssub.s32 %s9, 2
    %s16 = sadd.s32 %s9, 1
    %s17 = ssub.s32 %s9, %s16
    %p18 = scmp.eq.s32.totalorder %s17, 0
    %s20 = sadd.s32 %s19, 1
    %s21 = scalar_select %p18, %s19, %s20
    %p24 = pneg %p18
    %p25 = scmp.eq.s32.totalorder %s9, 1
    %p26 = por %p24, %p25
    %p27 = scmp.ne.s32.totalorder %s19, %s22
    %p28 = scmp.eq.s32.totalorder %s9, 0
    %p29 = por %p27, %p28
    %p30 = scmp.ne.s32.totalorder %s19, %s22
    %p31 = scmp.eq.s32.totalorder %s14, 1
    %p32 = por %p30, %p31
    %p33 = scmp.ne.s32.totalorder %s22, %s23
    %p34 = scmp.eq.s32.totalorder %s14, 0
    %p35 = por %p33, %p34
    %p36 = scmp.ne.s32.totalorder %s22, %s23
    %p37 = scmp.eq.s32.totalorder %s15, 1
    %p38 = por %p36, %p37
    %p40 = scmp.ne.s32.totalorder %s23, %s39
    %p41 = scmp.eq.s32.totalorder %s15, 0
    %p42 = por %p40, %p41
    %s44 = sadd.s32 %s43, 1
    %p47 = scmp.eq.s32.totalorder %s9, 1
    %p48 = scmp.ne.s32.totalorder %s43, %s45
    %p49 = scmp.eq.s32.totalorder %s9, 0
    %p50 = por %p48, %p49
    %p51 = scmp.ne.s32.totalorder %s43, %s45
    %p52 = scmp.eq.s32.totalorder %s14, 1
    %p53 = por %p51, %p52
    %p54 = scmp.ne.s32.totalorder %s45, %s46
    %p55 = scmp.eq.s32.totalorder %s14, 0
    %p56 = por %p54, %p55
    %p57 = scmp.ne.s32.totalorder %s45, %s46
    %p58 = scmp.eq.s32.totalorder %s15, 1
    %p59 = por %p57, %p58
    %p61 = scmp.ne.s32.totalorder %s46, %s60
    %p62 = scmp.eq.s32.totalorder %s15, 0
    %p63 = por %p61, %p62
    %s65 = sadd.s32 %s64, 1
    %p68 = scmp.eq.s32.totalorder %s9, 1
    %p69 = scmp.ne.s32.totalorder %s64, %s66
    %p70 = scmp.eq.s32.totalorder %s9, 0
    %p71 = por %p69, %p70
    %p72 = scmp.ne.s32.totalorder %s64, %s66
    %p73 = scmp.eq.s32.totalorder %s14, 1
    %p74 = por %p72, %p73
    %p75 = scmp.ne.s32.totalorder %s66, %s67
    %p76 = scmp.eq.s32.totalorder %s14, 0
    %p77 = por %p75, %p76
    %p78 = scmp.ne.s32.totalorder %s66, %s67
    %p79 = scmp.eq.s32.totalorder %s15, 1
    %p80 = por %p78, %p79
    %p82 = scmp.ne.s32.totalorder %s67, %s81
    %p83 = scmp.eq.s32.totalorder %s15, 0
    %p84 = por %p82, %p83
    %s85 = ssub.s32 %s9, %s16
    %p86 = scmp.eq.s32.totalorder %s85, 0
    %s88 = sadd.s32 %s87, 1
    %s89 = scalar_select %p86, %s87, %s88
    %p92 = pneg %p86
    %p93 = scmp.eq.s32.totalorder %s9, 1
    %p94 = por %p92, %p93
    %p95 = scmp.ne.s32.totalorder %s87, %s90
    %p96 = scmp.eq.s32.totalorder %s9, 0
    %p97 = por %p95, %p96
    %p98 = scmp.ne.s32.totalorder %s87, %s90
    %p99 = scmp.eq.s32.totalorder %s14, 1
    %p100 = por %p98, %p99
    %p101 = scmp.ne.s32.totalorder %s90, %s91
    %p102 = scmp.eq.s32.totalorder %s14, 0
    %p103 = por %p101, %p102
    %p104 = scmp.ne.s32.totalorder %s90, %s91
    %p105 = scmp.eq.s32.totalorder %s15, 1
    %p106 = por %p104, %p105
    %p108 = scmp.ne.s32.totalorder %s91, %s107
    %p109 = scmp.eq.s32.totalorder %s15, 0
    %p110 = por %p108, %p109
    %p111 = scmp.le.s32.totalorder 1, %s9
    %p112 = scmp.lt.s32.totalorder %s9, 3
    %p113 = pnand %p111, %p112
    %p114 = pneg %p113
    // Predicated region
    $region9: #{tpu_custom_call.1} parent=5 // pred_check
      _
    $region10: #{tpu_custom_call.1} parent=5 // pred_check_branch
      %116 = sbr.rel (%p113) target = $region12
    $region11: #{tpu_custom_call.1} parent=5 // pred_region
      %s117 = ssub.s32 %s9, 1
      // Predicated region
      $region13: #{tpu_custom_call.1} parent=11 // pred_check
        %p118 = pneg %p56
      $region14: #{tpu_custom_call.1} parent=11 // pred_check_branch
        %120 = sbr.rel (%p118) target = $region16
      $region15: #{tpu_custom_call.1} parent=11 // pred_region
        _
      $region16: #{tpu_custom_call.1} parent=11 // pred_fallthru
        _
      // Predicated region
      $region17: #{tpu_custom_call.1} parent=11 // pred_check
        %p121 = pneg %p77
      $region18: #{tpu_custom_call.1} parent=11 // pred_check_branch
        %123 = sbr.rel (%p121) target = $region20
      $region19: #{tpu_custom_call.1} parent=11 // pred_region
        _
      $region20: #{tpu_custom_call.1} parent=11 // pred_fallthru
        _
    $region12: #{tpu_custom_call.1} parent=5 // pred_fallthru
      _
    %p124 = scmp.lt.s32.totalorder %s9, 2
    // Predicated region
    $region21: #{tpu_custom_call.1} parent=5 // pred_check
      %p125 = pneg %p124
    $region22: #{tpu_custom_call.1} parent=5 // pred_check_branch
      %127 = sbr.rel (%p125) target = $region24
    $region23: #{tpu_custom_call.1} parent=5 // pred_region
      // Predicated region
      $region25: #{tpu_custom_call.1} parent=23 // pred_check
        %p128 = pneg %p29
      $region26: #{tpu_custom_call.1} parent=23 // pred_check_branch
        %130 = sbr.rel (%p128) target = $region28
      $region27: #{tpu_custom_call.1} parent=23 // pred_region
        %s131 = smul.u32 32, %s9
        %p132 = scmp.lt.s32.totalorder %s131, 63
        %s133 = scalar_select %p132, %s131, 63
        %s134 = smul.addr %s133, 8
        %s135 = scalar_lea.vmem %s0, %s134
        %s136 = smul.u32 32, %s9
      $region28: #{tpu_custom_call.1} parent=23 // pred_fallthru
        _
    $region24: #{tpu_custom_call.1} parent=5 // pred_fallthru
      _
    %p137 = scmp.le.s32.totalorder 1, %s9
    %p138 = scmp.lt.s32.totalorder %s9, 3
    %p139 = pnand %p137, %p138
    %p140 = pneg %p139
    // Predicated region
    $region29: #{tpu_custom_call.1} parent=5 // pred_check
      _
    $region30: #{tpu_custom_call.1} parent=5 // pred_check_branch
      %142 = sbr.rel (%p139) target = $region32
    $region31: #{tpu_custom_call.1} parent=5 // pred_region
      %s143 = ssub.s32 %s9, 1
      %s144 = smul.u32 32, %s14
      %p145 = scmp.lt.s32.totalorder %s144, 63
      %s146 = scalar_select %p145, %s144, 63
      %s147 = smul.addr %s146, 8
      %s148 = scalar_lea.vmem %s0, %s147
      %p149 = pneg %p35
      %p150 = pneg %p32
      %p151 = pneg %p56
      %p152 = pneg %p53
      %p153 = pneg %p77
      %p154 = pneg %p74
      %p155 = pneg %p103
      %p156 = pneg %p100
      %s157 = smul.u32 32, %s14
      %p158 = scmp.lt.s32.totalorder %s157, 63
      %s159 = scalar_select %p158, %s157, 63
      %s160 = smul.addr %s159, 8
      %s161 = scalar_lea.vmem %s3, %s160
      %s162 = smul.u32 32, %s14
      %p163 = scmp.lt.s32.totalorder %s162, 63
      %s164 = scalar_select %p163, %s162, 63
      %s165 = smul.addr %s164, 8
      %s166 = scalar_lea.vmem %s0, %s165
      %s167 = smul.u32 32, %s14
      %s168 = smul.u32 32, %s14
      %p169 = scmp.lt.s32.totalorder %s168, 63
      %s170 = scalar_select %p169, %s168, 63
      %s171 = smul.addr %s170, 8
      %s172 = scalar_lea.vmem %s3, %s171
      %s173 = smul.u32 32, %s14
      %v174 = vld [vmem:[%s166] sm:$0xff]
      %v175 = vld [vmem:[%s166 + $0x8] sm:$0xff]
      %v176 = vld [vmem:[%s166 + $0x10] sm:$0xff]
      %v177 = vld [vmem:[%s166 + $0x18] sm:$0xff]
      %v178 = vld [vmem:[%s166 + $0x20] sm:$0xff]
      %v179 = vld [vmem:[%s166 + $0x28] sm:$0xff]
      %v180 = vld [vmem:[%s166 + $0x30] sm:$0xff]
      %v181 = vld [vmem:[%s166 + $0x38] sm:$0xff]
      %v182 = vld [vmem:[%s166 + $0x40] sm:$0xff]
      %v183 = vld [vmem:[%s166 + $0x48] sm:$0xff]
      %v184 = vld [vmem:[%s166 + $0x50] sm:$0xff]
      %v185 = vld [vmem:[%s166 + $0x58] sm:$0xff]
      %v186 = vld [vmem:[%s166 + $0x60] sm:$0xff]
      %v187 = vld [vmem:[%s166 + $0x68] sm:$0xff]
      %v188 = vld [vmem:[%s166 + $0x70] sm:$0xff]
      %v189 = vld [vmem:[%s166 + $0x78] sm:$0xff]
      %v190 = vld [vmem:[%s166 + $0x80] sm:$0xff]
      %v191 = vld [vmem:[%s166 + $0x88] sm:$0xff]
      %v192 = vld [vmem:[%s166 + $0x90] sm:$0xff]
      %v193 = vld [vmem:[%s166 + $0x98] sm:$0xff]
      %v194 = vld [vmem:[%s166 + $0xa0] sm:$0xff]
      %v195 = vld [vmem:[%s166 + $0xa8] sm:$0xff]
      %v196 = vld [vmem:[%s166 + $0xb0] sm:$0xff]
      %v197 = vld [vmem:[%s166 + $0xb8] sm:$0xff]
      %v198 = vld [vmem:[%s166 + $0xc0] sm:$0xff]
      %v199 = vld [vmem:[%s166 + $0xc8] sm:$0xff]
      %v200 = vld [vmem:[%s166 + $0xd0] sm:$0xff]
      %v201 = vld [vmem:[%s166 + $0xd8] sm:$0xff]
      %v202 = vld [vmem:[%s166 + $0xe0] sm:$0xff]
      %v203 = vld [vmem:[%s166 + $0xe8] sm:$0xff]
      %v204 = vld [vmem:[%s166 + $0xf0] sm:$0xff]
      %v205 = vld [vmem:[%s166 + $0xf8] sm:$0xff]
      %v206 = vld [vmem:[%s1] sm:$0xff]
      %v207 = vld [vmem:[%s2] sm:$0x1]
      %v209 = vlaneseq
      %v210 = vshrl.u32 %v209, 7
      %v211 = vsub.s32 0, %v210
      %v212 = vrot.slane %v207, %v211
      %vm214 = vcmask 64512
      %v216 = vsel %vm214, %v174, 0
      %v219 = vsel %vm214, %v175, 0
      %v222 = vsel %vm214, %v176, 0
      %v225 = vsel %vm214, %v177, 0
      %v228 = vsel %vm214, %v178, 0
      %v231 = vsel %vm214, %v179, 0
      %v234 = vsel %vm214, %v180, 0
      %v237 = vsel %vm214, %v181, 0
      %v240 = vsel %vm214, %v182, 0
      %v243 = vsel %vm214, %v183, 0
      %v246 = vsel %vm214, %v184, 0
      %v249 = vsel %vm214, %v185, 0
      %v252 = vsel %vm214, %v186, 0
      %v255 = vsel %vm214, %v187, 0
      %v258 = vsel %vm214, %v188, 0
      %v261 = vsel %vm214, %v189, 0
      %v264 = vsel %vm214, %v190, 0
      %v267 = vsel %vm214, %v191, 0
      %v270 = vsel %vm214, %v192, 0
      %v273 = vsel %vm214, %v193, 0
      %v276 = vsel %vm214, %v194, 0
      %v279 = vsel %vm214, %v195, 0
      %v282 = vsel %vm214, %v196, 0
      %v285 = vsel %vm214, %v197, 0
      %v288 = vsel %vm214, %v198, 0
      %v291 = vsel %vm214, %v199, 0
      %v294 = vsel %vm214, %v200, 0
      %v297 = vsel %vm214, %v201, 0
      %v300 = vsel %vm214, %v202, 0
      %v303 = vsel %vm214, %v203, 0
      %v306 = vsel %vm214, %v204, 0
      %v309 = vsel %vm214, %v205, 0
      %311 = vmatprep.subr.mxu0 0.0
      %312 = vmatpush1.msra.mxu0 %v206
      %313 = vmatprep.subr.mxu0 0.0
      %314 = vmatpush1.msra.mxu0 0.0
      %315 = vmatprep.subr.mxu0 0.0
      %316 = vmatpush1.msra.mxu0 0.0
      %317 = vmatprep.subr.mxu0 0.0
      %318 = vmatpush1.msra.mxu0 0.0
      %319 = vmatprep.subr.mxu0 0.0
      %320 = vmatpush1.msra.mxu0 0.0
      %321 = vmatprep.subr.mxu0 0.0
      %322 = vmatpush1.msra.mxu0 0.0
      %323 = vmatprep.subr.mxu0 0.0
      %324 = vmatpush1.msra.mxu0 0.0
      %325 = vmatprep.subr.mxu0 0.0
      %326 = vmatpush1.msra.mxu0 0.0
      %327 = vmatprep.subr.mxu0 0.0
      %328 = vmatpush1.msra.mxu0 0.0
      %329 = vmatprep.subr.mxu0 0.0
      %330 = vmatpush1.msra.mxu0 0.0
      %331 = vmatprep.subr.mxu0 0.0
      %332 = vmatpush1.msra.mxu0 0.0
      %333 = vmatprep.subr.mxu0 0.0
      %334 = vmatpush1.msra.mxu0 0.0
      %335 = vmatprep.subr.mxu0 0.0
      %336 = vmatpush1.msra.mxu0 0.0
      %337 = vmatprep.subr.mxu0 0.0
      %338 = vmatpush1.msra.mxu0 0.0
      %339 = vmatprep.subr.mxu0 0.0
      %340 = vmatpush1.msra.mxu0 0.0
      %341 = vmatprep.subr.mxu0 0.0
      %342 = vmatpush1.msra.mxu0 0.0
      %343 = vmatprep.subr.mxu0 0.0
      %344 = vmatpush1.msra.mxu0 0.0
      %345 = vmatprep.subr.mxu0 0.0
      %346 = vmatpush1.msra.mxu0 0.0
      %347 = vmatprep.subr.mxu0 0.0
      %348 = vmatpush1.msra.mxu0 0.0
      %349 = vmatprep.subr.mxu0 0.0
      %350 = vmatpush1.msra.mxu0 0.0
      %351 = vmatprep.subr.mxu0 0.0
      %352 = vmatpush1.msra.mxu0 0.0
      %353 = vmatprep.subr.mxu0 0.0
      %354 = vmatpush1.msra.mxu0 0.0
      %355 = vmatprep.subr.mxu0 0.0
      %356 = vmatpush1.msra.mxu0 0.0
      %357 = vmatprep.subr.mxu0 0.0
      %358 = vmatpush1.msra.mxu0 0.0
      %359 = vmatprep.subr.mxu0 0.0
      %360 = vmatpush1.msra.mxu0 0.0
      %361 = vmatprep.subr.mxu0 0.0
      %362 = vmatpush1.msra.mxu0 0.0
      %363 = vmatprep.subr.mxu0 0.0
      %364 = vmatpush1.msra.mxu0 0.0
      %365 = vmatprep.subr.mxu0 0.0
      %366 = vmatpush1.msra.mxu0 0.0
      %367 = vmatprep.subr.mxu0 0.0
      %368 = vmatpush1.msra.mxu0 0.0
      %369 = vmatprep.subr.mxu0 0.0
      %370 = vmatpush1.msra.mxu0 0.0
      %371 = vmatprep.subr.mxu0 0.0
      %372 = vmatpush1.msra.mxu0 0.0
      %373 = vmatprep.subr.mxu0 0.0
      %374 = vmatpush1.msra.mxu0 0.0
      %375 = vmatprep.mubr.f32.mxu0 0.0
      %376 = vmatmul.mubr.f32.gmra.mrb[0].mxu0 %v216
      %v377 = vpop.f32.mrb[0].mxu0
      %v378 = vadd.f32 %v212, %v377
      %v379 = vpop.f32.mrb[0].mxu0
      %380 = vmatprep.mubr.f32.mxu0 0.0
      %381 = vmatmul.mubr.f32.gmra.mrb[0].mxu0 %v219
      %v382 = vpop.f32.mrb[0].mxu0
      %v383 = vadd.f32 %v212, %v382
      %v384 = vpop.f32.mrb[0].mxu0
      %385 = vmatprep.mubr.f32.mxu0 0.0
      %386 = vmatmul.mubr.f32.gmra.mrb[0].mxu0 %v222
      %v387 = vpop.f32.mrb[0].mxu0
      %v388 = vadd.f32 %v212, %v387
      %v389 = vpop.f32.mrb[0].mxu0
      %390 = vmatprep.mubr.f32.mxu0 0.0
      %391 = vmatmul.mubr.f32.gmra.mrb[0].mxu0 %v225
      %v392 = vpop.f32.mrb[0].mxu0
      %v393 = vadd.f32 %v212, %v392
      %v394 = vpop.f32.mrb[0].mxu0
      %395 = vmatprep.mubr.f32.mxu0 0.0
      %396 = vmatmul.mubr.f32.gmra.mrb[0].mxu0 %v228
      %v397 = vpop.f32.mrb[0].mxu0
      %v398 = vadd.f32 %v212, %v397
      %v399 = vpop.f32.mrb[0].mxu0
      %400 = vmatprep.mubr.f32.mxu0 0.0
      %401 = vmatmul.mubr.f32.gmra.mrb[0].mxu0 %v231
      %v402 = vpop.f32.mrb[0].mxu0
      %v403 = vadd.f32 %v212, %v402
      %v404 = vpop.f32.mrb[0].mxu0
      %405 = vmatprep.mubr.f32.mxu0 0.0
      %406 = vmatmul.mubr.f32.gmra.mrb[0].mxu0 %v234
      %v407 = vpop.f32.mrb[0].mxu0
      %v408 = vadd.f32 %v212, %v407
      %v409 = vpop.f32.mrb[0].mxu0
      %410 = vmatprep.mubr.f32.mxu0 0.0
      %411 = vmatmul.mubr.f32.gmra.mrb[0].mxu0 %v237
      %v412 = vpop.f32.mrb[0].mxu0
      %v413 = vadd.f32 %v212, %v412
      %v414 = vpop.f32.mrb[0].mxu0
      %415 = vmatprep.mubr.f32.mxu0 0.0
      %416 = vmatmul.mubr.f32.gmra.mrb[0].mxu0 %v240
      %v417 = vpop.f32.mrb[0].mxu0
      %v418 = vadd.f32 %v212, %v417
      %v419 = vpop.f32.mrb[0].mxu0
      %420 = vmatprep.mubr.f32.mxu0 0.0
      %421 = vmatmul.mubr.f32.gmra.mrb[0].mxu0 %v243
      %v422 = vpop.f32.mrb[0].mxu0
      %v423 = vadd.f32 %v212, %v422
      %v424 = vpop.f32.mrb[0].mxu0
      %425 = vmatprep.mubr.f32.mxu0 0.0
      %426 = vmatmul.mubr.f32.gmra.mrb[0].mxu0 %v246
      %v427 = vpop.f32.mrb[0].mxu0
      %v428 = vadd.f32 %v212, %v427
      %v429 = vpop.f32.mrb[0].mxu0
      %430 = vmatprep.mubr.f32.mxu0 0.0
      %431 = vmatmul.mubr.f32.gmra.mrb[0].mxu0 %v249
      %v432 = vpop.f32.mrb[0].mxu0
      %v433 = vadd.f32 %v212, %v432
      %v434 = vpop.f32.mrb[0].mxu0
      %435 = vmatprep.mubr.f32.mxu0 0.0
      %436 = vmatmul.mubr.f32.gmra.mrb[0].mxu0 %v252
      %v437 = vpop.f32.mrb[0].mxu0
      %v438 = vadd.f32 %v212, %v437
      %v439 = vpop.f32.mrb[0].mxu0
      %440 = vmatprep.mubr.f32.mxu0 0.0
      %441 = vmatmul.mubr.f32.gmra.mrb[0].mxu0 %v255
      %v442 = vpop.f32.mrb[0].mxu0
      %v443 = vadd.f32 %v212, %v442
      %v444 = vpop.f32.mrb[0].mxu0
      %445 = vmatprep.mubr.f32.mxu0 0.0
      %446 = vmatmul.mubr.f32.gmra.mrb[0].mxu0 %v258
      %v447 = vpop.f32.mrb[0].mxu0
      %v448 = vadd.f32 %v212, %v447
      %v449 = vpop.f32.mrb[0].mxu0
      %450 = vmatprep.mubr.f32.mxu0 0.0
      %451 = vmatmul.mubr.f32.gmra.mrb[0].mxu0 %v261
      %v452 = vpop.f32.mrb[0].mxu0
      %v453 = vadd.f32 %v212, %v452
      %v454 = vpop.f32.mrb[0].mxu0
      %455 = vmatprep.mubr.f32.mxu0 0.0
      %456 = vmatmul.mubr.f32.gmra.mrb[0].mxu0 %v264
      %v457 = vpop.f32.mrb[0].mxu0
      %v458 = vadd.f32 %v212, %v457
      %v459 = vpop.f32.mrb[0].mxu0
      %460 = vmatprep.mubr.f32.mxu0 0.0
      %461 = vmatmul.mubr.f32.gmra.mrb[0].mxu0 %v267
      %v462 = vpop.f32.mrb[0].mxu0
      %v463 = vadd.f32 %v212, %v462
      %v464 = vpop.f32.mrb[0].mxu0
      %465 = vmatprep.mubr.f32.mxu0 0.0
      %466 = vmatmul.mubr.f32.gmra.mrb[0].mxu0 %v270
      %v467 = vpop.f32.mrb[0].mxu0
      %v468 = vadd.f32 %v212, %v467
      %v469 = vpop.f32.mrb[0].mxu0
      %470 = vmatprep.mubr.f32.mxu0 0.0
      %471 = vmatmul.mubr.f32.gmra.mrb[0].mxu0 %v273
      %v472 = vpop.f32.mrb[0].mxu0
      %v473 = vadd.f32 %v212, %v472
      %v474 = vpop.f32.mrb[0].mxu0
      %475 = vmatprep.mubr.f32.mxu0 0.0
      %476 = vmatmul.mubr.f32.gmra.mrb[0].mxu0 %v276
      %v477 = vpop.f32.mrb[0].mxu0
      %v478 = vadd.f32 %v212, %v477
      %v479 = vpop.f32.mrb[0].mxu0
      %480 = vmatprep.mubr.f32.mxu0 0.0
      %481 = vmatmul.mubr.f32.gmra.mrb[0].mxu0 %v279
      %v482 = vpop.f32.mrb[0].mxu0
      %v483 = vadd.f32 %v212, %v482
      %v484 = vpop.f32.mrb[0].mxu0
      %485 = vmatprep.mubr.f32.mxu0 0.0
      %486 = vmatmul.mubr.f32.gmra.mrb[0].mxu0 %v282
      %v487 = vpop.f32.mrb[0].mxu0
      %v488 = vadd.f32 %v212, %v487
      %v489 = vpop.f32.mrb[0].mxu0
      %490 = vmatprep.mubr.f32.mxu0 0.0
      %491 = vmatmul.mubr.f32.gmra.mrb[0].mxu0 %v285
      %v492 = vpop.f32.mrb[0].mxu0
      %v493 = vadd.f32 %v212, %v492
      %v494 = vpop.f32.mrb[0].mxu0
      %495 = vmatprep.mubr.f32.mxu0 0.0
      %496 = vmatmul.mubr.f32.gmra.mrb[0].mxu0 %v288
      %v497 = vpop.f32.mrb[0].mxu0
      %v498 = vadd.f32 %v212, %v497
      %v499 = vpop.f32.mrb[0].mxu0
      %500 = vmatprep.mubr.f32.mxu0 0.0
      %501 = vmatmul.mubr.f32.gmra.mrb[0].mxu0 %v291
      %v502 = vpop.f32.mrb[0].mxu0
      %v503 = vadd.f32 %v212, %v502
      %v504 = vpop.f32.mrb[0].mxu0
      %505 = vmatprep.mubr.f32.mxu0 0.0
      %506 = vmatmul.mubr.f32.gmra.mrb[0].mxu0 %v294
      %v507 = vpop.f32.mrb[0].mxu0
      %v508 = vadd.f32 %v212, %v507
      %v509 = vpop.f32.mrb[0].mxu0
      %510 = vmatprep.mubr.f32.mxu0 0.0
      %511 = vmatmul.mubr.f32.gmra.mrb[0].mxu0 %v297
      %v512 = vpop.f32.mrb[0].mxu0
      %v513 = vadd.f32 %v212, %v512
      %v514 = vpop.f32.mrb[0].mxu0
      %515 = vmatprep.mubr.f32.mxu0 0.0
      %516 = vmatmul.mubr.f32.gmra.mrb[0].mxu0 %v300
      %v517 = vpop.f32.mrb[0].mxu0
      %v518 = vadd.f32 %v212, %v517
      %v519 = vpop.f32.mrb[0].mxu0
      %520 = vmatprep.mubr.f32.mxu0 0.0
      %521 = vmatmul.mubr.f32.gmra.mrb[0].mxu0 %v303
      %v522 = vpop.f32.mrb[0].mxu0
      %v523 = vadd.f32 %v212, %v522
      %v524 = vpop.f32.mrb[0].mxu0
      %525 = vmatprep.mubr.f32.mxu0 0.0
      %526 = vmatmul.mubr.f32.gmra.mrb[0].mxu0 %v306
      %v527 = vpop.f32.mrb[0].mxu0
      %v528 = vadd.f32 %v212, %v527
      %v529 = vpop.f32.mrb[0].mxu0
      %530 = vmatprep.mubr.f32.mxu0 0.0
      %531 = vmatmul.mubr.f32.gmra.mrb[0].mxu0 %v309
      %v532 = vpop.f32.mrb[0].mxu0
      %v533 = vadd.f32 %v212, %v532
      %v534 = vpop.f32.mrb[0].mxu0
      %535 = vdwg.mxu0
      %v536 = vmax.f32 %v378, 0.0
      %v537 = vmax.f32 %v383, 0.0
      %v538 = vmax.f32 %v388, 0.0
      %v539 = vmax.f32 %v393, 0.0
      %v540 = vmax.f32 %v398, 0.0
      %v541 = vmax.f32 %v403, 0.0
      %v542 = vmax.f32 %v408, 0.0
      %v543 = vmax.f32 %v413, 0.0
      %v544 = vmax.f32 %v418, 0.0
      %v545 = vmax.f32 %v423, 0.0
      %v546 = vmax.f32 %v428, 0.0
      %v547 = vmax.f32 %v433, 0.0
      %v548 = vmax.f32 %v438, 0.0
      %v549 = vmax.f32 %v443, 0.0
      %v550 = vmax.f32 %v448, 0.0
      %v551 = vmax.f32 %v453, 0.0
      %v552 = vmax.f32 %v458, 0.0
      %v553 = vmax.f32 %v463, 0.0
      %v554 = vmax.f32 %v468, 0.0
      %v555 = vmax.f32 %v473, 0.0
      %v556 = vmax.f32 %v478, 0.0
      %v557 = vmax.f32 %v483, 0.0
      %v558 = vmax.f32 %v488, 0.0
      %v559 = vmax.f32 %v493, 0.0
      %v560 = vmax.f32 %v498, 0.0
      %v561 = vmax.f32 %v503, 0.0
      %v562 = vmax.f32 %v508, 0.0
      %v563 = vmax.f32 %v513, 0.0
      %v564 = vmax.f32 %v518, 0.0
      %v565 = vmax.f32 %v523, 0.0
      %v566 = vmax.f32 %v528, 0.0
      %v567 = vmax.f32 %v533, 0.0
      %vm568 = vcmask 31744
      %569 = vst.msk [vmem:[%s172] sm:$0xff] %vm568, %v536
      %570 = vst.msk [vmem:[%s172 + $0x8] sm:$0xff] %vm568, %v537
      %571 = vst.msk [vmem:[%s172 + $0x10] sm:$0xff] %vm568, %v538
      %572 = vst.msk [vmem:[%s172 + $0x18] sm:$0xff] %vm568, %v539
      %573 = vst.msk [vmem:[%s172 + $0x20] sm:$0xff] %vm568, %v540
      %574 = vst.msk [vmem:[%s172 + $0x28] sm:$0xff] %vm568, %v541
      %575 = vst.msk [vmem:[%s172 + $0x30] sm:$0xff] %vm568, %v542
      %576 = vst.msk [vmem:[%s172 + $0x38] sm:$0xff] %vm568, %v543
      %577 = vst.msk [vmem:[%s172 + $0x40] sm:$0xff] %vm568, %v544
      %578 = vst.msk [vmem:[%s172 + $0x48] sm:$0xff] %vm568, %v545
      %579 = vst.msk [vmem:[%s172 + $0x50] sm:$0xff] %vm568, %v546
      %580 = vst.msk [vmem:[%s172 + $0x58] sm:$0xff] %vm568, %v547
      %581 = vst.msk [vmem:[%s172 + $0x60] sm:$0xff] %vm568, %v548
      %582 = vst.msk [vmem:[%s172 + $0x68] sm:$0xff] %vm568, %v549
      %583 = vst.msk [vmem:[%s172 + $0x70] sm:$0xff] %vm568, %v550
      %584 = vst.msk [vmem:[%s172 + $0x78] sm:$0xff] %vm568, %v551
      %585 = vst.msk [vmem:[%s172 + $0x80] sm:$0xff] %vm568, %v552
      %586 = vst.msk [vmem:[%s172 + $0x88] sm:$0xff] %vm568, %v553
      %587 = vst.msk [vmem:[%s172 + $0x90] sm:$0xff] %vm568, %v554
      %588 = vst.msk [vmem:[%s172 + $0x98] sm:$0xff] %vm568, %v555
      %589 = vst.msk [vmem:[%s172 + $0xa0] sm:$0xff] %vm568, %v556
      %590 = vst.msk [vmem:[%s172 + $0xa8] sm:$0xff] %vm568, %v557
      %591 = vst.msk [vmem:[%s172 + $0xb0] sm:$0xff] %vm568, %v558
      %592 = vst.msk [vmem:[%s172 + $0xb8] sm:$0xff] %vm568, %v559
      %593 = vst.msk [vmem:[%s172 + $0xc0] sm:$0xff] %vm568, %v560
      %594 = vst.msk [vmem:[%s172 + $0xc8] sm:$0xff] %vm568, %v561
      %595 = vst.msk [vmem:[%s172 + $0xd0] sm:$0xff] %vm568, %v562
      %596 = vst.msk [vmem:[%s172 + $0xd8] sm:$0xff] %vm568, %v563
      %597 = vst.msk [vmem:[%s172 + $0xe0] sm:$0xff] %vm568, %v564
      %598 = vst.msk [vmem:[%s172 + $0xe8] sm:$0xff] %vm568, %v565
      %599 = vst.msk [vmem:[%s172 + $0xf0] sm:$0xff] %vm568, %v566
      %600 = vst.msk [vmem:[%s172 + $0xf8] sm:$0xff] %vm568, %v567
      %s601 = smul.u32 32, %s14
      %p602 = scmp.lt.s32.totalorder %s601, 63
      %s603 = scalar_select %p602, %s601, 63
      %s604 = smul.addr %s603, 8
      %s605 = scalar_lea.vmem %s3, %s604
      // Predicated region
      $region33: #{tpu_custom_call.1} parent=31 // pred_check
        %p606 = pneg %p100
      $region34: #{tpu_custom_call.1} parent=31 // pred_check_branch
        %608 = sbr.rel (%p606) target = $region36
      $region35: #{tpu_custom_call.1} parent=31 // pred_region
        %s609 = smul.u32 32, %s14
      $region36: #{tpu_custom_call.1} parent=31 // pred_fallthru
        _
    $region32: #{tpu_custom_call.1} parent=5 // pred_fallthru
      _
    %p610 = scmp.le.s32.totalorder 2, %s9
    // Predicated region
    $region37: #{tpu_custom_call.1} parent=5 // pred_check
      %p611 = pneg %p610
    $region38: #{tpu_custom_call.1} parent=5 // pred_check_branch
      %613 = sbr.rel (%p611) target = $region40
    $region39: #{tpu_custom_call.1} parent=5 // pred_region
      %s614 = ssub.s32 %s9, 2
      // Predicated region
      $region41: #{tpu_custom_call.1} parent=39 // pred_check
        %p615 = pneg %p106
      $region42: #{tpu_custom_call.1} parent=39 // pred_check_branch
        %617 = sbr.rel (%p615) target = $region44
      $region43: #{tpu_custom_call.1} parent=39 // pred_region
        %s618 = smul.u32 32, %s15
        %p619 = scmp.lt.s32.totalorder %s618, 63
        %s620 = scalar_select %p619, %s618, 63
        %s621 = smul.addr %s620, 8
        %s622 = scalar_lea.vmem %s3, %s621
      $region44: #{tpu_custom_call.1} parent=39 // pred_fallthru
        _
    $region40: #{tpu_custom_call.1} parent=5 // pred_fallthru
      _
  $region6: #{tpu_custom_call.1} parent=0 // loop_footer
    %s13 = sadd.s32 1, %s9
  $region7: #{tpu_custom_call.1} parent=0 // loop_footer_branch
    %8 = sbr.rel target = $region3
  $region8: #{tpu_custom_call.1} parent=0 // loop_exit
    _

</llo_original>
